<compile_context>
chip_gen: v7x
topology: tpu7x:2x2x1
jax: 0.10.0
libtpu: 0.0.40
codegen_flags: <defaults>
</compile_context>

<pallas_src>
import functools

import jax
import jax.numpy as jnp
from jax.experimental import pallas as pl
from jax.experimental.pallas import tpu as pltpu

_LANE = 128
_SUBLANE = 8
_MIB = 1 << 20


def _round_down(v: int, m: int) -> int:
    return (v // m) * m


def _tpu_vmem_capacity_bytes() -> int:
    """Best-effort per-core VMEM capacity; conservative (v7x-sized) fallback."""
    cap = 64 * _MIB
    try:
        info = pltpu.get_tpu_info()
        cap = int(getattr(info, "vmem_capacity_bytes", cap))
    except Exception:
        pass
    return max(cap, 32 * _MIB)


def _compiler_params(dims, live_block_bytes: int, vmem_capacity: int):
    """Explicit scoped-VMEM limit sized to the double-buffered block footprint."""
    limit = int(live_block_bytes) + 8 * _MIB          # footprint + headroom
    limit = min(limit, (vmem_capacity * 3) // 4)      # never ask for most of VMEM
    limit = max(limit, 16 * _MIB)                     # never below smallest default
    return pltpu.CompilerParams(dimension_semantics=dims, vmem_limit_bytes=limit)


# ----------------------------- kernels --------------------------------------


def _rowwise_norm_kernel(x_ref, o_ref):
    """Single-pass: block = (bt, N). Per-row max|x|, exact reciprocal, vmul."""
    x = x_ref[...]                                            # native dtype
    m = jnp.max(jnp.abs(x), axis=-1, keepdims=True).astype(jnp.float32)
    scale = 1.0 / (m + jnp.float32(1e-10))
    o_ref[...] = (x.astype(jnp.float32) * scale).astype(o_ref.dtype)


def _rowmax_inv_kernel(x_ref, m_ref, *, n_total, chunk, needs_mask):
    """Two-pass, pass 1: running per-row max|x|; finalize to 1/(max + 1e-10).

    Masking of the partial last chunk is hoisted out of the hot loop: it only
    runs on the final chunk (pl.when) and only exists when N % chunk != 0.
    """
    k = pl.program_id(1)
    nk = pl.num_programs(1)

    @pl.when(k == 0)
    def _init():
        m_ref[...] = jnp.zeros_like(m_ref)                    # |x| >= 0

    x = x_ref[...]                                            # (bt, chunk), native dtype

    if needs_mask:
        @pl.when(k < nk - 1)
        def _interior():
            cm = jnp.max(jnp.abs(x), axis=-1, keepdims=True).astype(jnp.float32)
            m_ref[...] = jnp.maximum(m_ref[...], cm)

        @pl.when(k == nk - 1)
        def _last_chunk():
            col = jax.lax.broadcasted_iota(jnp.int32, x.shape, 1) + k * chunk
            a = jnp.where(col < n_total, jnp.abs(x), jnp.zeros_like(x))
            cm = jnp.max(a, axis=-1, keepdims=True).astype(jnp.float32)
            m_ref[...] = jnp.maximum(m_ref[...], cm)
    else:
        cm = jnp.max(jnp.abs(x), axis=-1, keepdims=True).astype(jnp.float32)
        m_ref[...] = jnp.maximum(m_ref[...], cm)

    @pl.when(k == nk - 1)
    def _finalize():
        m_ref[...] = 1.0 / (m_ref[...] + jnp.float32(1e-10))


def _apply_scale_kernel(x_ref, s_ref, o_ref):
    """Two-pass, pass 2: o = x * precomputed inverse scale (f32 multiply)."""
    o_ref[...] = (x_ref[...].astype(jnp.float32) * s_ref[...]).astype(o_ref.dtype)


# ----------------------------- wrapper ---------------------------------------


def normalize3d(x: jax.Array, *, max_block_bytes: int | None = None) -> jax.Array:
    """Pallas equivalent of Normalize3D.forward.

    x: [B, F, T] -> [B, F, T], each batch scaled by 1 / (max|x| + 1e-10).
    """
    if x.ndim != 3:
        raise ValueError("Input should be 3D: [batch_size X num_features X num_steps]")
    B, F, T = x.shape
    N = F * T
    itemsize = jnp.dtype(x.dtype).itemsize
    row_bytes = N * itemsize

    vmem_cap = _tpu_vmem_capacity_bytes()
    if max_block_bytes is None:
        # ~16 MiB blocks on 128-MiB-VMEM chips (v5e/v6e), ~8 MiB on v7x (64 MiB).
        max_block_bytes = min(24 * _MIB, max(2 * _MIB, vmem_cap // 8))
    block_budget = max(1, int(max_block_bytes))

    # Free reshape (contiguous row-major): lane-dense last dim of width N.
    x2 = x.reshape(B, N)

    rows_per_block = block_budget // row_bytes

    if rows_per_block >= B or rows_per_block >= _SUBLANE:
        # -------- single pass: pack batch rows, whole row per block --------
        if rows_per_block >= B:
            bt = B
            total_bytes = B * row_bytes
            # Split only when it yields >= 4 sublane-aligned, >= ~1 MiB blocks:
            # gives each v7x TC >= 2 pipelined blocks and gives single-TC chips
            # DMA/compute/writeback overlap; small inputs stay a single block.
            if B >= 4 * _SUBLANE and total_bytes >= 4 * _MIB:
                bt = max(_SUBLANE, _round_down(B // 8, _SUBLANE))
                while bt * row_bytes < _MIB and pl.cdiv(B, 2 * bt) >= 4:
                    bt *= 2
        else:
            bt = _round_down(rows_per_block, _SUBLANE)        # >= 8 here
        grid_b = pl.cdiv(B, bt)
        block_bytes = bt * row_bytes

        out2 = pl.pallas_call(
            _rowwise_norm_kernel,
            out_shape=jax.ShapeDtypeStruct((B, N), x.dtype),
            grid_spec=pltpu.PrefetchScalarGridSpec(
                num_scalar_prefetch=0,
                grid=(grid_b,),
                in_specs=[pl.BlockSpec((bt, N), lambda b: (b, 0))],
                out_specs=pl.BlockSpec((bt, N), lambda b: (b, 0)),
            ),
            compiler_params=_compiler_params(
                ("parallel",), 4 * block_bytes, vmem_cap),     # 2 bufs x (in+out)
        )(x2)
    else:
        # -------- two pass: tile N into 128-aligned chunks --------
        bt = B if B < _SUBLANE else _SUBLANE                  # sublane-legal row block
        nt = (block_budget // (bt * itemsize) // _LANE) * _LANE
        nt = max(_LANE, min(nt, pl.cdiv(N, _LANE) * _LANE))
        grid_b = pl.cdiv(B, bt)
        grid_k = pl.cdiv(N, nt)
        needs_mask = (N % nt) != 0                            # trace-time known
        block_bytes = bt * nt * itemsize

        # Pass 1: per-batch running max|x| -> finalized to 1/(max + 1e-10).
        inv_scale = pl.pallas_call(
            functools.partial(_rowmax_inv_kernel,
                              n_total=N, chunk=nt, needs_mask=needs_mask),
            out_shape=jax.ShapeDtypeStruct((B, 1), jnp.float32),
            grid_spec=pltpu.PrefetchScalarGridSpec(
                num_scalar_prefetch=0,
                grid=(grid_b, grid_k),                        # reduction axis last
                in_specs=[pl.BlockSpec((bt, nt), lambda b, k: (b, k))],
                out_specs=pl.BlockSpec((bt, 1), lambda b, k: (b, 0)),
            ),
            compiler_params=_compiler_params(
                ("parallel", "arbitrary"), 2 * block_bytes, vmem_cap),
        )(x2)

        # Pass 2: stream x again and apply the precomputed inverse scale.
        out2 = pl.pallas_call(
            _apply_scale_kernel,
            out_shape=jax.ShapeDtypeStruct((B, N), x.dtype),
            grid_spec=pltpu.PrefetchScalarGridSpec(
                num_scalar_prefetch=0,
                grid=(grid_b, grid_k),
                in_specs=[pl.BlockSpec((bt, nt), lambda b, k: (b, k)),
                          pl.BlockSpec((bt, 1), lambda b, k: (b, 0))],
                out_specs=pl.BlockSpec((bt, nt), lambda b, k: (b, k)),
            ),
            compiler_params=_compiler_params(
                ("parallel", "parallel"), 4 * block_bytes, vmem_cap),
        )(x2, inv_scale)

    return out2.reshape(B, F, T)


def _reference(x: jax.Array) -> jax.Array:
    # Pure-JAX mirror of the PyTorch forward.
    B, F, T = x.shape
    x2 = x.reshape(B, F * T)
    m = jnp.max(jnp.abs(x2), axis=1, keepdims=True)
    return (x2 / (m + 1e-10)).reshape(B, F, T)


if __name__ == "__main__":
    key = jax.random.PRNGKey(0)
    k1, k2, k3 = jax.random.split(key, 3)

    # Small shape consistent with the module: [batch, num_features, num_steps].
    B, F, T = 2, 4, 16
    x = jax.random.normal(k1, (B, F, T), dtype=jnp.float32) * 5.0
    out = jax.block_until_ready(normalize3d(x))
    assert out.shape == (B, F, T)
    assert jnp.allclose(out, _reference(x), atol=1e-6, rtol=1e-6), "single-pass mismatch"

    # Exercise the tiled two-pass path (rows exceeding a shrunken block budget),
    # including the hoisted partial-chunk masking.
    B2, F2, T2 = 3, 4, 100
    x_big = jax.random.normal(k2, (B2, F2, T2), dtype=jnp.float32) * 3.0
    out_big = jax.block_until_ready(normalize3d(x_big, max_block_bytes=1024))
    assert out_big.shape == (B2, F2, T2)
    assert jnp.allclose(out_big, _reference(x_big), atol=1e-6, rtol=1e-6), "two-pass mismatch"

    # Exercise the multi-step single-pass path (batch split for pipelining /
    # dual-TC sharding): 64 x 32 x 512 f32 = 4 MiB total.
    B3, F3, T3 = 64, 32, 512
    x_mid = jax.random.normal(k3, (B3, F3, T3), dtype=jnp.float32) * 2.0
    out_mid = jax.block_until_ready(normalize3d(x_mid))
    assert out_mid.shape == (B3, F3, T3)
    assert jnp.allclose(out_mid, _reference(x_mid), atol=1e-6, rtol=1e-6), "split-pass mismatch"

    print("KERNEL_OK")
</pallas_src>

<mosaic_0001>
module attributes {stable_mosaic.version = 11 : i64} {
  func.func @_rowwise_norm_kernel(%arg0: i32, %arg1: memref<2x64xf32, #tpu.memory_space<vmem>>, %arg2: memref<2x64xf32, #tpu.memory_space<vmem>>) attributes {dimension_semantics = [#tpu.dimension_semantics<parallel>], iteration_bounds = array<i64: 1>, scalar_prefetch = 0 : i64, scratch_operands = 0 : i64, tpu.core_type = #tpu.core_type<tc>, window_params = [{transform_indices = @transform_0, window_bounds = array<i64: 2, 64>}, {transform_indices = @transform_1, window_bounds = array<i64: 2, 64>}]} {
    %c0 = arith.constant 0 : index
    %c0_0 = arith.constant 0 : index
    %0 = vector.load %arg1[%c0, %c0_0] : memref<2x64xf32, #tpu.memory_space<vmem>>, vector<2x64xf32>
    %1 = math.absf %0 : vector<2x64xf32>
    %cst = arith.constant dense<0xFF800000> : vector<2xf32>
    %2 = vector.multi_reduction <maximumf>, %1, %cst [1] : vector<2x64xf32> to vector<2xf32>
    %3 = vector.shape_cast %2 : vector<2xf32> to vector<2x1xf32>
    %cst_1 = arith.constant 1.000000e-10 : f32
    %4 = vector.broadcast %cst_1 : f32 to vector<2x1xf32>
    %5 = arith.addf %3, %4 : vector<2x1xf32>
    %cst_2 = arith.constant 1.000000e+00 : f32
    %6 = vector.broadcast %cst_2 : f32 to vector<2x1xf32>
    %7 = arith.divf %6, %5 : vector<2x1xf32>
    %8 = vector.broadcast %7 : vector<2x1xf32> to vector<2x64xf32>
    %9 = arith.mulf %0, %8 : vector<2x64xf32>
    %c0_3 = arith.constant 0 : index
    %c0_4 = arith.constant 0 : index
    %10 = vector.load %arg2[%c0_3, %c0_4] : memref<2x64xf32, #tpu.memory_space<vmem>>, vector<2x64xf32>
    tpu.vector_store %arg2[%c0_3, %c0_4], %9 {strides = array<i32>} : memref<2x64xf32, #tpu.memory_space<vmem>>, vector<2x64xf32>,
    return
  }
  func.func @transform_0(%arg0: i32) -> (i32, i32) {
    %c0_i32 = arith.constant 0 : i32
    %c0_i32_0 = arith.constant 0 : i32
    return %arg0, %c0_i32 : i32, i32
  }
  func.func @transform_1(%arg0: i32) -> (i32, i32) {
    %c0_i32 = arith.constant 0 : i32
    %c0_i32_0 = arith.constant 0 : i32
    return %arg0, %c0_i32 : i32, i32
  }
}

</mosaic_0001>

<llo_original>
// kernel: tpu_custom_call.1
$region0: #{tpu_custom_call.1}
  #allocation0 [shape = 'u32[]', space=smem, size = 0x4, offset = 0x4, fixed_abs, tag = 'smem constant byte address 0x4 - core index']
  #allocation1 [shape = 'u32[144,128]{1,0:T(1,128)}', space=vmem, size = 0x12000, scoped, tag = 'internal scratch']
  %s0 = inlined_call_operand.hbm [shape: f32[2,64], index: 0, kind: input, shape index: {}]
  %s1 = inlined_call_operand.hbm [shape: f32[2,64], index: 1, kind: output, shape index: {}]
  %s2 = sld [smem:[#allocation0]]
  $region18: #{tpu_custom_call.1} parent=0
    _
  %s4 = ssub.s32 1, %s2
  %s5 = scalar_select 0, %s4, %s2
  $region1: #{tpu_custom_call.1} parent=0
    #allocation2 [shape = 'u8[1024]{0}', space=vmem, size = 0x400, scoped, tag = 'input window, operand 0, single buffered']
    #allocation3 [shape = 's32[1]{0}', space=sflag, size = 0x4, scoped, tag = 'scoped memory for tpu_custom_call.1']
    #allocation4 [shape = 's32[1]{0}', space=sflag, size = 0x4, scoped, tag = 'scoped memory for tpu_custom_call.1']
    #allocation5 [shape = 'u8[1024]{0}', space=vmem, size = 0x400, scoped, tag = 'output window, operand 0, single buffered']
    %6 = vsyncpa [#allocation3], 0
    %7 = vsyncpa [#allocation4], 0
    // Predicated region
    $region2: #{tpu_custom_call.1} parent=1 // pred_check
      _
    $region3: #{tpu_custom_call.1} parent=1 // pred_check_branch
      %9 = sbr.rel (0) target = $region5
    $region4: #{tpu_custom_call.1} parent=1 // pred_region
      %s11 = ssub.s32 32, 32
      %12 = vsyncadd [#allocation3], %s11
      %s14 = sshll.u32 [#allocation2], 4
      %s15 = int_to_ptr.vmem [resolvable:$true] %s14
      %17 = dma.hbm_to_vmem [thread:$0]  %s0, 32, %s15, [#allocation3]
    $region5: #{tpu_custom_call.1} parent=1 // pred_fallthru
      _
    // Predicated region
    $region6: #{tpu_custom_call.1} parent=1 // pred_check
      _
    $region7: #{tpu_custom_call.1} parent=1 // pred_check_branch
      %19 = sbr.rel (0) target = $region9
    $region8: #{tpu_custom_call.1} parent=1 // pred_region
      %20 = dma.done [#allocation3], 32
    $region9: #{tpu_custom_call.1} parent=1 // pred_fallthru
      _
    %v21 = vld [vmem:[#allocation2] sm:$0x3]
    %v22 = vand.u32 2147483647, %v21
    %vm23 = vcmask 517120
    %v24 = vsel %vm23, %v22, -inf
    %25 = vmax.xlane.f32.xlu0 %v24
    %v26 = vpop.xlane.xlu0 %25
    %v27 = vadd.f32 %v26, 1e-10
    %v28 = vrcp.pop %v27
    %v29 = vmul.f32 1.0, %v28
    %v30 = vmul.f32 %v21, %v29
    %31 = vst.msk [vmem:[#allocation5] sm:$0x3] %vm23, %v30
    // Predicated region
    $region10: #{tpu_custom_call.1} parent=1 // pred_check
      _
    $region11: #{tpu_custom_call.1} parent=1 // pred_check_branch
      %33 = sbr.rel (0) target = $region13
    $region12: #{tpu_custom_call.1} parent=1 // pred_region
      %s35 = ssub.s32 32, 32
      %36 = vsyncadd [#allocation4], %s35
      %s38 = sshll.u32 [#allocation5], 4
      %s39 = int_to_ptr.vmem [resolvable:$true] %s38
      %41 = dma.vmem_to_hbm [thread:$0]  %s39, 32, %s1, [#allocation4]
    $region13: #{tpu_custom_call.1} parent=1 // pred_fallthru
      _
    // Predicated region
    $region14: #{tpu_custom_call.1} parent=1 // pred_check
      _
    $region15: #{tpu_custom_call.1} parent=1 // pred_check_branch
      %43 = sbr.rel (0) target = $region17
    $region16: #{tpu_custom_call.1} parent=1 // pred_region
      %44 = dma.done [#allocation4], 32
    $region17: #{tpu_custom_call.1} parent=1 // pred_fallthru
      _
    %45 = vsyncpa [#allocation3], 1
    %46 = vsyncpa [#allocation4], 1

</llo_original>
